<compile_context>
chip_gen: v7x
topology: tpu7x:2x2x1
jax: 0.10.0
libtpu: 0.0.40
codegen_flags: <defaults>
</compile_context>

<pallas_src>
import jax
import jax.numpy as jnp
from jax.experimental import pallas as pl
from jax.experimental.pallas import tpu as pltpu

INPUT_SIZE = 12
HIDDEN_SIZE = 100
NUM_CLASSES = 32

HIDDEN_PAD = 128   # 100 -> 128 (lane width)


def mlp_kernel(x_ref, w1_ref, b1_ref, w2_ref, b2_ref, w3_ref, b3_ref, o_ref):
    # x_ref: (TB, 12) f32; w* bf16; b1/b2 f32 (1, 128); b3 f32 (1, 32)
    # Cast the tiny activation tile to bf16 in-kernel (cheap VPU work).
    x = x_ref[...].astype(jnp.bfloat16)

    # Layer 1: Linear + ReLU (bf16 MXU inputs, f32 accumulate, f32 bias/ReLU)
    h1 = jnp.dot(x, w1_ref[...], preferred_element_type=jnp.float32)
    h1 = jnp.maximum(h1 + b1_ref[...], 0.0)

    # Layer 2: Linear + ReLU
    h2 = jnp.dot(h1.astype(jnp.bfloat16), w2_ref[...],
                 preferred_element_type=jnp.float32)
    h2 = jnp.maximum(h2 + b2_ref[...], 0.0)

    # Layer 3: Linear (no activation) -> narrow (TB, 32) f32 store
    out = jnp.dot(h2.astype(jnp.bfloat16), w3_ref[...],
                  preferred_element_type=jnp.float32)
    o_ref[...] = (out + b3_ref[...]).astype(o_ref.dtype)


def _pad2d(a, rows, cols):
    return jnp.pad(a, ((0, rows - a.shape[0]), (0, cols - a.shape[1])))


def prepare_params(w1, b1, w2, b2, w3, b3):
    """One-time prep: pad logical (in, out) weights to lane-friendly shapes and
    cast MXU inputs to bf16.  Call once and reuse; do NOT call per forward.

    Zero padding of the hidden dim is exact: padded hidden columns get bias 0
    -> ReLU(0) = 0, and the corresponding padded weight rows of the next layer
    are 0.  The output dim (32) is NOT padded.
    """
    w1p = _pad2d(w1, INPUT_SIZE, HIDDEN_PAD).astype(jnp.bfloat16)
    w2p = _pad2d(w2, HIDDEN_PAD, HIDDEN_PAD).astype(jnp.bfloat16)
    w3p = _pad2d(w3, HIDDEN_PAD, NUM_CLASSES).astype(jnp.bfloat16)
    b1p = _pad2d(b1, 1, HIDDEN_PAD).astype(jnp.float32)
    b2p = _pad2d(b2, 1, HIDDEN_PAD).astype(jnp.float32)
    b3p = b3.astype(jnp.float32).reshape(1, NUM_CLASSES)
    return w1p, b1p, w2p, b2p, w3p, b3p


def neural_net_forward(x, prepared_params, *, tb=2048):
    """x: (B, 12) f32.  prepared_params: output of prepare_params (cached).
    Returns (B, 32) f32, matching the PyTorch forward."""
    w1p, b1p, w2p, b2p, w3p, b3p = prepared_params
    B = x.shape[0]

    # Batch tile: multiple of 8 sublanes, capped at `tb`.
    TB = min(tb, max(8, ((B + 7) // 8) * 8))
    B_pad = ((B + TB - 1) // TB) * TB
    if B_pad != B:
        # Only pads when B is not a multiple of TB (ragged last tile).
        x = jnp.pad(x, ((0, B_pad - B), (0, 0)))

    grid = (B_pad // TB,)

    # Weights/biases: full-array blocks, constant index_map -> VMEM-resident.
    const = lambda shape: pl.BlockSpec(shape, lambda i: (0, 0))

    flops = 2 * B_pad * (INPUT_SIZE * HIDDEN_PAD
                         + HIDDEN_PAD * HIDDEN_PAD
                         + HIDDEN_PAD * NUM_CLASSES)
    bytes_accessed = (B_pad * (INPUT_SIZE * 4 + NUM_CLASSES * 4)
                      + (INPUT_SIZE + HIDDEN_PAD) * HIDDEN_PAD * 2
                      + HIDDEN_PAD * NUM_CLASSES * 2
                      + 2 * HIDDEN_PAD * 4 + NUM_CLASSES * 4)

    out = pl.pallas_call(
        mlp_kernel,
        out_shape=jax.ShapeDtypeStruct((B_pad, NUM_CLASSES), jnp.float32),
        grid=grid,
        in_specs=[
            pl.BlockSpec((TB, INPUT_SIZE), lambda i: (i, 0)),    # x tile (streamed)
            const((INPUT_SIZE, HIDDEN_PAD)),                     # w1
            const((1, HIDDEN_PAD)),                              # b1
            const((HIDDEN_PAD, HIDDEN_PAD)),                     # w2
            const((1, HIDDEN_PAD)),                              # b2
            const((HIDDEN_PAD, NUM_CLASSES)),                    # w3
            const((1, NUM_CLASSES)),                             # b3
        ],
        out_specs=pl.BlockSpec((TB, NUM_CLASSES), lambda i: (i, 0)),
        compiler_params=pltpu.CompilerParams(
            dimension_semantics=("parallel",)),                  # megacore on v7x
        cost_estimate=pl.CostEstimate(flops=flops, transcendentals=0,
                                      bytes_accessed=bytes_accessed),
    )(x, w1p, b1p, w2p, b2p, w3p, b3p)

    if B_pad != B:
        out = out[:B]
    return out


def init_linear_params(key, fan_in, fan_out):
    """Mimics torch.nn.Linear default init (uniform +/- 1/sqrt(fan_in)).
    Returns W with shape (fan_in, fan_out) (pre-transposed) and b (1, fan_out)."""
    kw, kb = jax.random.split(key)
    bound = 1.0 / jnp.sqrt(float(fan_in))
    w = jax.random.uniform(kw, (fan_in, fan_out), jnp.float32, -bound, bound)
    b = jax.random.uniform(kb, (1, fan_out), jnp.float32, -bound, bound)
    return w, b


def reference_forward_f32(x, w1, b1, w2, b2, w3, b3):
    h1 = jnp.maximum(x @ w1 + b1, 0.0)
    h2 = jnp.maximum(h1 @ w2 + b2, 0.0)
    return h2 @ w3 + b3


def reference_forward_bf16(x, w1, b1, w2, b2, w3, b3):
    """Same math as the kernel (bf16 matmul inputs, f32 accumulation)."""
    dot = lambda a, b: jnp.dot(a.astype(jnp.bfloat16), b.astype(jnp.bfloat16),
                               preferred_element_type=jnp.float32)
    h1 = jnp.maximum(dot(x, w1) + b1, 0.0)
    h2 = jnp.maximum(dot(h1, w2) + b2, 0.0)
    return dot(h2, w3) + b3


if __name__ == "__main__":
    key = jax.random.PRNGKey(0)
    k_x, k1, k2, k3 = jax.random.split(key, 4)

    batch = 8
    x = jax.random.normal(k_x, (batch, INPUT_SIZE), jnp.float32)

    w1, b1 = init_linear_params(k1, INPUT_SIZE, HIDDEN_SIZE)
    w2, b2 = init_linear_params(k2, HIDDEN_SIZE, HIDDEN_SIZE)
    w3, b3 = init_linear_params(k3, HIDDEN_SIZE, NUM_CLASSES)

    # One-time param prep (hoisted out of the per-call path).
    params = prepare_params(w1, b1, w2, b2, w3, b3)
    params = jax.block_until_ready(params)

    out = neural_net_forward(x, params)
    out = jax.block_until_ready(out)
    assert out.shape == (batch, NUM_CLASSES)

    # Tight check against a reference using the same bf16-in / f32-acc math.
    ref_bf16 = reference_forward_bf16(x, w1, b1, w2, b2, w3, b3)
    assert jnp.allclose(out, ref_bf16, atol=2e-3, rtol=2e-3)

    # Loose check against the full-f32 PyTorch-equivalent reference
    # (bf16 matmul inputs loosen the achievable tolerance).
    ref_f32 = reference_forward_f32(x, w1, b1, w2, b2, w3, b3)
    assert jnp.allclose(out, ref_f32, atol=3e-2, rtol=3e-2)

    print("KERNEL_OK")
</pallas_src>

<mosaic_0001>
module attributes {stable_mosaic.version = 11 : i64} {
  func.func @mlp_kernel(%arg0: i32, %arg1: memref<8x12xf32, #tpu.memory_space<vmem>>, %arg2: memref<12x128xbf16, #tpu.memory_space<vmem>>, %arg3: memref<1x128xf32, #tpu.memory_space<vmem>>, %arg4: memref<128x128xbf16, #tpu.memory_space<vmem>>, %arg5: memref<1x128xf32, #tpu.memory_space<vmem>>, %arg6: memref<128x32xbf16, #tpu.memory_space<vmem>>, %arg7: memref<1x32xf32, #tpu.memory_space<vmem>>, %arg8: memref<8x32xf32, #tpu.memory_space<vmem>>) attributes {dimension_semantics = [#tpu.dimension_semantics<parallel>], iteration_bounds = array<i64: 1>, scalar_prefetch = 0 : i64, scratch_operands = 0 : i64, tpu.core_type = #tpu.core_type<tc>, window_params = [{transform_indices = @transform_0, window_bounds = array<i64: 8, 12>}, {pipeline_mode = #tpu.pipeline_mode<synchronous>, transform_indices = @transform_1, window_bounds = array<i64: 12, 128>}, {pipeline_mode = #tpu.pipeline_mode<synchronous>, transform_indices = @transform_2, window_bounds = array<i64: 1, 128>}, {pipeline_mode = #tpu.pipeline_mode<synchronous>, transform_indices = @transform_3, window_bounds = array<i64: 128, 128>}, {pipeline_mode = #tpu.pipeline_mode<synchronous>, transform_indices = @transform_4, window_bounds = array<i64: 1, 128>}, {pipeline_mode = #tpu.pipeline_mode<synchronous>, transform_indices = @transform_5, window_bounds = array<i64: 128, 32>}, {pipeline_mode = #tpu.pipeline_mode<synchronous>, transform_indices = @transform_6, window_bounds = array<i64: 1, 32>}, {transform_indices = @transform_7, window_bounds = array<i64: 8, 32>}]} {
    %c0 = arith.constant 0 : index
    %c0_0 = arith.constant 0 : index
    %0 = vector.load %arg1[%c0, %c0_0] : memref<8x12xf32, #tpu.memory_space<vmem>>, vector<8x12xf32>
    %1 = arith.truncf %0 : vector<8x12xf32> to vector<8x12xbf16>
    %c0_1 = arith.constant 0 : index
    %c0_2 = arith.constant 0 : index
    %2 = vector.load %arg2[%c0_1, %c0_2] : memref<12x128xbf16, #tpu.memory_space<vmem>>, vector<12x128xbf16>
    %cst = arith.constant dense<0.000000e+00> : vector<8x128xf32>
    %3 = tpu.matmul %1, %2, %cst {dimension_numbers = #tpu.dot_dimension_numbers<[1], [0], [0], [1], [0, 0, 1, 1], [], []>} : vector<8x12xbf16>, vector<12x128xbf16>, vector<8x128xf32> -> vector<8x128xf32>
    %c0_3 = arith.constant 0 : index
    %c0_4 = arith.constant 0 : index
    %4 = vector.load %arg3[%c0_3, %c0_4] : memref<1x128xf32, #tpu.memory_space<vmem>>, vector<1x128xf32>
    %5 = vector.broadcast %4 : vector<1x128xf32> to vector<8x128xf32>
    %6 = arith.addf %3, %5 : vector<8x128xf32>
    %cst_5 = arith.constant 0.000000e+00 : f32
    %7 = vector.broadcast %cst_5 : f32 to vector<8x128xf32>
    %8 = arith.maximumf %6, %7 : vector<8x128xf32>
    %9 = arith.truncf %8 : vector<8x128xf32> to vector<8x128xbf16>
    %c0_6 = arith.constant 0 : index
    %c0_7 = arith.constant 0 : index
    %10 = vector.load %arg4[%c0_6, %c0_7] : memref<128x128xbf16, #tpu.memory_space<vmem>>, vector<128x128xbf16>
    %cst_8 = arith.constant dense<0.000000e+00> : vector<8x128xf32>
    %11 = tpu.matmul %9, %10, %cst_8 {dimension_numbers = #tpu.dot_dimension_numbers<[1], [0], [0], [1], [0, 0, 1, 1], [], []>} : vector<8x128xbf16>, vector<128x128xbf16>, vector<8x128xf32> -> vector<8x128xf32>
    %c0_9 = arith.constant 0 : index
    %c0_10 = arith.constant 0 : index
    %12 = vector.load %arg5[%c0_9, %c0_10] : memref<1x128xf32, #tpu.memory_space<vmem>>, vector<1x128xf32>
    %13 = vector.broadcast %12 : vector<1x128xf32> to vector<8x128xf32>
    %14 = arith.addf %11, %13 : vector<8x128xf32>
    %cst_11 = arith.constant 0.000000e+00 : f32
    %15 = vector.broadcast %cst_11 : f32 to vector<8x128xf32>
    %16 = arith.maximumf %14, %15 : vector<8x128xf32>
    %17 = arith.truncf %16 : vector<8x128xf32> to vector<8x128xbf16>
    %c0_12 = arith.constant 0 : index
    %c0_13 = arith.constant 0 : index
    %18 = vector.load %arg6[%c0_12, %c0_13] : memref<128x32xbf16, #tpu.memory_space<vmem>>, vector<128x32xbf16>
    %cst_14 = arith.constant dense<0.000000e+00> : vector<8x32xf32>
    %19 = tpu.matmul %17, %18, %cst_14 {dimension_numbers = #tpu.dot_dimension_numbers<[1], [0], [0], [1], [0, 0, 1, 1], [], []>} : vector<8x128xbf16>, vector<128x32xbf16>, vector<8x32xf32> -> vector<8x32xf32>
    %c0_15 = arith.constant 0 : index
    %c0_16 = arith.constant 0 : index
    %20 = vector.load %arg7[%c0_15, %c0_16] : memref<1x32xf32, #tpu.memory_space<vmem>>, vector<1x32xf32>
    %21 = vector.broadcast %20 : vector<1x32xf32> to vector<8x32xf32>
    %22 = arith.addf %19, %21 : vector<8x32xf32>
    %c0_17 = arith.constant 0 : index
    %c0_18 = arith.constant 0 : index
    %23 = vector.load %arg8[%c0_17, %c0_18] : memref<8x32xf32, #tpu.memory_space<vmem>>, vector<8x32xf32>
    tpu.vector_store %arg8[%c0_17, %c0_18], %22 {strides = array<i32>} : memref<8x32xf32, #tpu.memory_space<vmem>>, vector<8x32xf32>,
    return
  }
  func.func @transform_0(%arg0: i32) -> (i32, i32) {
    %c0_i32 = arith.constant 0 : i32
    %c0_i32_0 = arith.constant 0 : i32
    return %arg0, %c0_i32 : i32, i32
  }
  func.func @transform_1(%arg0: i32) -> (i32, i32) {
    %c0_i32 = arith.constant 0 : i32
    %c0_i32_0 = arith.constant 0 : i32
    %c0_i32_1 = arith.constant 0 : i32
    return %c0_i32, %c0_i32_0 : i32, i32
  }
  func.func @transform_2(%arg0: i32) -> (i32, i32) {
    %c0_i32 = arith.constant 0 : i32
    %c0_i32_0 = arith.constant 0 : i32
    %c0_i32_1 = arith.constant 0 : i32
    return %c0_i32, %c0_i32_0 : i32, i32
  }
  func.func @transform_3(%arg0: i32) -> (i32, i32) {
    %c0_i32 = arith.constant 0 : i32
    %c0_i32_0 = arith.constant 0 : i32
    %c0_i32_1 = arith.constant 0 : i32
    return %c0_i32, %c0_i32_0 : i32, i32
  }
  func.func @transform_4(%arg0: i32) -> (i32, i32) {
    %c0_i32 = arith.constant 0 : i32
    %c0_i32_0 = arith.constant 0 : i32
    %c0_i32_1 = arith.constant 0 : i32
    return %c0_i32, %c0_i32_0 : i32, i32
  }
  func.func @transform_5(%arg0: i32) -> (i32, i32) {
    %c0_i32 = arith.constant 0 : i32
    %c0_i32_0 = arith.constant 0 : i32
    %c0_i32_1 = arith.constant 0 : i32
    return %c0_i32, %c0_i32_0 : i32, i32
  }
  func.func @transform_6(%arg0: i32) -> (i32, i32) {
    %c0_i32 = arith.constant 0 : i32
    %c0_i32_0 = arith.constant 0 : i32
    %c0_i32_1 = arith.constant 0 : i32
    return %c0_i32, %c0_i32_0 : i32, i32
  }
  func.func @transform_7(%arg0: i32) -> (i32, i32) {
    %c0_i32 = arith.constant 0 : i32
    %c0_i32_0 = arith.constant 0 : i32
    return %arg0, %c0_i32 : i32, i32
  }
}

</mosaic_0001>

<llo_original>
// kernel: tpu_custom_call.1
$region0: #{tpu_custom_call.1}
  #allocation0 [shape = 'u32[]', space=smem, size = 0x4, offset = 0x4, fixed_abs, tag = 'smem constant byte address 0x4 - core index']
  #allocation1 [shape = 'u32[144,128]{1,0:T(1,128)}', space=vmem, size = 0x12000, scoped, tag = 'internal scratch']
  %s0 = inlined_call_operand.vmem [shape: f32[8,12], index: 0, kind: input, shape index: {}]
  %s1 = inlined_call_operand.vmem [shape: bf16[12,128], index: 1, kind: input, shape index: {}]
  %s2 = inlined_call_operand.vmem [shape: f32[1,128], index: 2, kind: input, shape index: {}]
  %s3 = inlined_call_operand.vmem [shape: bf16[128,128], index: 3, kind: input, shape index: {}]
  %s4 = inlined_call_operand.vmem [shape: f32[1,128], index: 4, kind: input, shape index: {}]
  %s5 = inlined_call_operand.vmem [shape: bf16[128,32], index: 5, kind: input, shape index: {}]
  %s6 = inlined_call_operand.vmem [shape: f32[1,32], index: 6, kind: input, shape index: {}]
  %s7 = inlined_call_operand.hbm [shape: f32[8,32], index: 7, kind: output, shape index: {}]
  %s8 = sld [smem:[#allocation0]]
  $region38: #{tpu_custom_call.1} parent=0
    _
  %s10 = ssub.s32 1, %s8
  %s11 = scalar_select 0, %s10, %s8
  $region1: #{tpu_custom_call.1} parent=0
    #allocation2 [shape = 'u8[4096]{0}', space=vmem, size = 0x1000, scoped, tag = 'output window, operand 0, single buffered']
    #allocation3 [shape = 's32[1]{0}', space=sflag, size = 0x4, scoped, tag = 'scoped memory for tpu_custom_call.1']
    %12 = vsyncpa [#allocation3], 0
    // Predicated region
    $region2: #{tpu_custom_call.1} parent=1 // pred_check
      _
    $region3: #{tpu_custom_call.1} parent=1 // pred_check_branch
      %14 = sbr.rel (0) target = $region5
    $region4: #{tpu_custom_call.1} parent=1 // pred_region
      _
    $region5: #{tpu_custom_call.1} parent=1 // pred_fallthru
      _
    // Predicated region
    $region6: #{tpu_custom_call.1} parent=1 // pred_check
      _
    $region7: #{tpu_custom_call.1} parent=1 // pred_check_branch
      %16 = sbr.rel (0) target = $region9
    $region8: #{tpu_custom_call.1} parent=1 // pred_region
      _
    $region9: #{tpu_custom_call.1} parent=1 // pred_fallthru
      _
    // Predicated region
    $region10: #{tpu_custom_call.1} parent=1 // pred_check
      _
    $region11: #{tpu_custom_call.1} parent=1 // pred_check_branch
      %18 = sbr.rel (0) target = $region13
    $region12: #{tpu_custom_call.1} parent=1 // pred_region
      _
    $region13: #{tpu_custom_call.1} parent=1 // pred_fallthru
      _
    // Predicated region
    $region14: #{tpu_custom_call.1} parent=1 // pred_check
      _
    $region15: #{tpu_custom_call.1} parent=1 // pred_check_branch
      %20 = sbr.rel (0) target = $region17
    $region16: #{tpu_custom_call.1} parent=1 // pred_region
      _
    $region17: #{tpu_custom_call.1} parent=1 // pred_fallthru
      _
    // Predicated region
    $region18: #{tpu_custom_call.1} parent=1 // pred_check
      _
    $region19: #{tpu_custom_call.1} parent=1 // pred_check_branch
      %22 = sbr.rel (0) target = $region21
    $region20: #{tpu_custom_call.1} parent=1 // pred_region
      _
    $region21: #{tpu_custom_call.1} parent=1 // pred_fallthru
      _
    // Predicated region
    $region22: #{tpu_custom_call.1} parent=1 // pred_check
      _
    $region23: #{tpu_custom_call.1} parent=1 // pred_check_branch
      %24 = sbr.rel (0) target = $region25
    $region24: #{tpu_custom_call.1} parent=1 // pred_region
      _
    $region25: #{tpu_custom_call.1} parent=1 // pred_fallthru
      _
    // Predicated region
    $region26: #{tpu_custom_call.1} parent=1 // pred_check
      _
    $region27: #{tpu_custom_call.1} parent=1 // pred_check_branch
      %26 = sbr.rel (0) target = $region29
    $region28: #{tpu_custom_call.1} parent=1 // pred_region
      _
    $region29: #{tpu_custom_call.1} parent=1 // pred_fallthru
      _
    %v28 = vld [vmem:[%s0] sm:$0xff]
    %v29 = vpack.c.bf16 %v28, %v28
    %v30 = vld [vmem:[%s1] sm:$0xf]
    %v31 = vld [vmem:[%s1 + $0x4] sm:$0x3]
    %v32 = vld [vmem:[%s2] sm:$0x1]
    %v34 = vlaneseq
    %v35 = vshrl.u32 %v34, 7
    %v36 = vsub.s32 0, %v35
    %v37 = vrot.slane %v32, %v36
    %v41 = vunpack.c.l.b16 %v30
    %v42 = vunpack.c.l.b16 %v31
    %v43 = vpack.c.b16 %v42, %v41
    %vm44 = vcmask 97280
    %v46 = vsel %vm44, %v29, 0
    %vm48 = vcmask 1045504
    %v50 = vsel %vm48, %v43, 0
    %52 = vmatprep.subr.bf16.mxu0 0
    %53 = vmatpush1.bf16.msra.mxu0 %v50
    %54 = vmatprep.subr.bf16.mxu0 0
    %55 = vmatpush1.bf16.msra.mxu0 0
    %56 = vmatprep.subr.bf16.mxu0 0
    %57 = vmatpush1.bf16.msra.mxu0 0
    %58 = vmatprep.subr.bf16.mxu0 0
    %59 = vmatpush1.bf16.msra.mxu0 0
    %60 = vmatprep.subr.bf16.mxu0 0
    %61 = vmatpush1.bf16.msra.mxu0 0
    %62 = vmatprep.subr.bf16.mxu0 0
    %63 = vmatpush1.bf16.msra.mxu0 0
    %64 = vmatprep.subr.bf16.mxu0 0
    %65 = vmatpush1.bf16.msra.mxu0 0
    %66 = vmatprep.subr.bf16.mxu0 0
    %67 = vmatpush1.bf16.msra.mxu0 0
    %68 = vmatprep.subr.bf16.mxu0 0
    %69 = vmatpush1.bf16.msra.mxu0 0
    %70 = vmatprep.subr.bf16.mxu0 0
    %71 = vmatpush1.bf16.msra.mxu0 0
    %72 = vmatprep.subr.bf16.mxu0 0
    %73 = vmatpush1.bf16.msra.mxu0 0
    %74 = vmatprep.subr.bf16.mxu0 0
    %75 = vmatpush1.bf16.msra.mxu0 0
    %76 = vmatprep.subr.bf16.mxu0 0
    %77 = vmatpush1.bf16.msra.mxu0 0
    %78 = vmatprep.subr.bf16.mxu0 0
    %79 = vmatpush1.bf16.msra.mxu0 0
    %80 = vmatprep.subr.bf16.mxu0 0
    %81 = vmatpush1.bf16.msra.mxu0 0
    %82 = vmatprep.subr.bf16.mxu0 0
    %83 = vmatpush1.bf16.msra.mxu0 0
    %84 = vmatprep.mubr.bf16.mxu0 0
    %85 = vmatmul.mubr.bf16.gmra.mrb[0].mxu0 %v46
    %v86 = vpop.f32.mrb[0].mxu0
    %v87 = vadd.f32 %v37, %v86
    %v88 = vpop.f32.mrb[0].mxu0
    %v89 = vpop.f32.mrb[0].mxu0
    %v90 = vpop.f32.mrb[0].mxu0
    %91 = vdwg.mxu0
    %v92 = vmax.f32 %v87, 0.0
    %v93 = vpack.c.bf16 %v92, %v92
    %v94 = vld [vmem:[%s3] sm:$0xf]
    %v95 = vld [vmem:[%s3 + $0x4] sm:$0xf]
    %v96 = vld [vmem:[%s3 + $0x8] sm:$0xf]
    %v97 = vld [vmem:[%s3 + $0xc] sm:$0xf]
    %v98 = vld [vmem:[%s3 + $0x10] sm:$0xf]
    %v99 = vld [vmem:[%s3 + $0x14] sm:$0xf]
    %v100 = vld [vmem:[%s3 + $0x18] sm:$0xf]
    %v101 = vld [vmem:[%s3 + $0x1c] sm:$0xf]
    %v102 = vld [vmem:[%s3 + $0x20] sm:$0xf]
    %v103 = vld [vmem:[%s3 + $0x24] sm:$0xf]
    %v104 = vld [vmem:[%s3 + $0x28] sm:$0xf]
    %v105 = vld [vmem:[%s3 + $0x2c] sm:$0xf]
    %v106 = vld [vmem:[%s3 + $0x30] sm:$0xf]
    %v107 = vld [vmem:[%s3 + $0x34] sm:$0xf]
    %v108 = vld [vmem:[%s3 + $0x38] sm:$0xf]
    %v109 = vld [vmem:[%s3 + $0x3c] sm:$0xf]
    %v110 = vld [vmem:[%s4] sm:$0x1]
    %v112 = vlaneseq
    %v113 = vshrl.u32 %v112, 7
    %v114 = vsub.s32 0, %v113
    %v115 = vrot.slane %v110, %v114
    %v133 = vunpack.c.l.b16 %v94
    %v134 = vunpack.c.l.b16 %v95
    %v135 = vunpack.c.l.b16 %v96
    %v136 = vunpack.c.l.b16 %v97
    %v137 = vunpack.c.l.b16 %v98
    %v138 = vunpack.c.l.b16 %v99
    %v139 = vunpack.c.l.b16 %v100
    %v140 = vunpack.c.l.b16 %v101
    %v141 = vunpack.c.l.b16 %v102
    %v142 = vunpack.c.l.b16 %v103
    %v143 = vunpack.c.l.b16 %v104
    %v144 = vunpack.c.l.b16 %v105
    %v145 = vunpack.c.l.b16 %v106
    %v146 = vunpack.c.l.b16 %v107
    %v147 = vunpack.c.l.b16 %v108
    %v148 = vunpack.c.l.b16 %v109
    %v149 = vpack.c.b16 %v134, %v133
    %v150 = vpack.c.b16 %v136, %v135
    %v151 = vpack.c.b16 %v138, %v137
    %v152 = vpack.c.b16 %v140, %v139
    %v153 = vpack.c.b16 %v142, %v141
    %v154 = vpack.c.b16 %v144, %v143
    %v155 = vpack.c.b16 %v146, %v145
    %v156 = vpack.c.b16 %v148, %v147
    %165 = vmatprep.subr.bf16.mxu0 0
    %166 = vmatpush1.bf16.msra.mxu0 %v149
    %167 = vmatprep.subr.bf16.mxu0 0
    %168 = vmatpush1.bf16.msra.mxu0 %v150
    %169 = vmatprep.subr.bf16.mxu0 0
    %170 = vmatpush1.bf16.msra.mxu0 %v151
    %171 = vmatprep.subr.bf16.mxu0 0
    %172 = vmatpush1.bf16.msra.mxu0 %v152
    %173 = vmatprep.subr.bf16.mxu0 0
    %174 = vmatpush1.bf16.msra.mxu0 %v153
    %175 = vmatprep.subr.bf16.mxu0 0
    %176 = vmatpush1.bf16.msra.mxu0 %v154
    %177 = vmatprep.subr.bf16.mxu0 0
    %178 = vmatpush1.bf16.msra.mxu0 %v155
    %179 = vmatprep.subr.bf16.mxu0 0
    %180 = vmatpush1.bf16.msra.mxu0 %v156
    %181 = vmatprep.subr.bf16.mxu0 0
    %182 = vmatpush1.bf16.msra.mxu0 0
    %183 = vmatprep.subr.bf16.mxu0 0
    %184 = vmatpush1.bf16.msra.mxu0 0
    %185 = vmatprep.subr.bf16.mxu0 0
    %186 = vmatpush1.bf16.msra.mxu0 0
    %187 = vmatprep.subr.bf16.mxu0 0
    %188 = vmatpush1.bf16.msra.mxu0 0
    %189 = vmatprep.subr.bf16.mxu0 0
    %190 = vmatpush1.bf16.msra.mxu0 0
    %191 = vmatprep.subr.bf16.mxu0 0
    %192 = vmatpush1.bf16.msra.mxu0 0
    %193 = vmatprep.subr.bf16.mxu0 0
    %194 = vmatpush1.bf16.msra.mxu0 0
    %195 = vmatprep.subr.bf16.mxu0 0
    %196 = vmatpush1.bf16.msra.mxu0 0
    %197 = vmatprep.mubr.bf16.mxu0 0
    %198 = vmatmul.mubr.bf16.gmra.mrb[0].mxu0 %v93
    %v199 = vpop.f32.mrb[0].mxu0
    %v200 = vadd.f32 %v115, %v199
    %v201 = vpop.f32.mrb[0].mxu0
    %v202 = vpop.f32.mrb[0].mxu0
    %v203 = vpop.f32.mrb[0].mxu0
    %204 = vdwg.mxu0
    %v205 = vmax.f32 %v200, 0.0
    %v206 = vpack.c.bf16 %v205, %v205
    %v207 = vld [vmem:[%s5] sm:$0xf]
    %v208 = vld [vmem:[%s5 + $0x4] sm:$0xf]
    %v209 = vld [vmem:[%s5 + $0x8] sm:$0xf]
    %v210 = vld [vmem:[%s5 + $0xc] sm:$0xf]
    %v211 = vld [vmem:[%s5 + $0x10] sm:$0xf]
    %v212 = vld [vmem:[%s5 + $0x14] sm:$0xf]
    %v213 = vld [vmem:[%s5 + $0x18] sm:$0xf]
    %v214 = vld [vmem:[%s5 + $0x1c] sm:$0xf]
    %v215 = vld [vmem:[%s5 + $0x20] sm:$0xf]
    %v216 = vld [vmem:[%s5 + $0x24] sm:$0xf]
    %v217 = vld [vmem:[%s5 + $0x28] sm:$0xf]
    %v218 = vld [vmem:[%s5 + $0x2c] sm:$0xf]
    %v219 = vld [vmem:[%s5 + $0x30] sm:$0xf]
    %v220 = vld [vmem:[%s5 + $0x34] sm:$0xf]
    %v221 = vld [vmem:[%s5 + $0x38] sm:$0xf]
    %v222 = vld [vmem:[%s5 + $0x3c] sm:$0xf]
    %v223 = vld [vmem:[%s6] sm:$0x1]
    %v225 = vlaneseq
    %v226 = vshrl.u32 %v225, 7
    %v227 = vsub.s32 0, %v226
    %v228 = vrot.slane %v223, %v227
    %v246 = vunpack.c.l.b16 %v207
    %v247 = vunpack.c.l.b16 %v208
    %v248 = vunpack.c.l.b16 %v209
    %v249 = vunpack.c.l.b16 %v210
    %v250 = vunpack.c.l.b16 %v211
    %v251 = vunpack.c.l.b16 %v212
    %v252 = vunpack.c.l.b16 %v213
    %v253 = vunpack.c.l.b16 %v214
    %v254 = vunpack.c.l.b16 %v215
    %v255 = vunpack.c.l.b16 %v216
    %v256 = vunpack.c.l.b16 %v217
    %v257 = vunpack.c.l.b16 %v218
    %v258 = vunpack.c.l.b16 %v219
    %v259 = vunpack.c.l.b16 %v220
    %v260 = vunpack.c.l.b16 %v221
    %v261 = vunpack.c.l.b16 %v222
    %v262 = vpack.c.b16 %v247, %v246
    %v263 = vpack.c.b16 %v249, %v248
    %v264 = vpack.c.b16 %v251, %v250
    %v265 = vpack.c.b16 %v253, %v252
    %v266 = vpack.c.b16 %v255, %v254
    %v267 = vpack.c.b16 %v257, %v256
    %v268 = vpack.c.b16 %v259, %v258
    %v269 = vpack.c.b16 %v261, %v260
    %278 = vmatprep.subr.bf16.mxu0 0
    %279 = vmatpush1.bf16.msra.mxu0 %v262
    %280 = vmatprep.subr.bf16.mxu0 0
    %281 = vmatpush1.bf16.msra.mxu0 %v263
    %282 = vmatprep.subr.bf16.mxu0 0
    %283 = vmatpush1.bf16.msra.mxu0 %v264
    %284 = vmatprep.subr.bf16.mxu0 0
    %285 = vmatpush1.bf16.msra.mxu0 %v265
    %286 = vmatprep.subr.bf16.mxu0 0
    %287 = vmatpush1.bf16.msra.mxu0 %v266
    %288 = vmatprep.subr.bf16.mxu0 0
    %289 = vmatpush1.bf16.msra.mxu0 %v267
    %290 = vmatprep.subr.bf16.mxu0 0
    %291 = vmatpush1.bf16.msra.mxu0 %v268
    %292 = vmatprep.subr.bf16.mxu0 0
    %293 = vmatpush1.bf16.msra.mxu0 %v269
    %294 = vmatprep.subr.bf16.mxu0 0
    %295 = vmatpush1.bf16.msra.mxu0 0
    %296 = vmatprep.subr.bf16.mxu0 0
    %297 = vmatpush1.bf16.msra.mxu0 0
    %298 = vmatprep.subr.bf16.mxu0 0
    %299 = vmatpush1.bf16.msra.mxu0 0
    %300 = vmatprep.subr.bf16.mxu0 0
    %301 = vmatpush1.bf16.msra.mxu0 0
    %302 = vmatprep.subr.bf16.mxu0 0
    %303 = vmatpush1.bf16.msra.mxu0 0
    %304 = vmatprep.subr.bf16.mxu0 0
    %305 = vmatpush1.bf16.msra.mxu0 0
    %306 = vmatprep.subr.bf16.mxu0 0
    %307 = vmatpush1.bf16.msra.mxu0 0
    %308 = vmatprep.subr.bf16.mxu0 0
    %309 = vmatpush1.bf16.msra.mxu0 0
    %310 = vmatprep.mubr.bf16.mxu0 0
    %311 = vmatmul.mubr.bf16.gmra.mrb[0].mxu0 %v206
    %v312 = vpop.f32.mrb[0].mxu0
    %v313 = vadd.f32 %v228, %v312
    %v314 = vpop.f32.mrb[0].mxu0
    %v315 = vpop.f32.mrb[0].mxu0
    %v316 = vpop.f32.mrb[0].mxu0
    %317 = vdwg.mxu0
    %vm318 = vcmask 261120
    %319 = vst.msk [vmem:[#allocation2] sm:$0xff] %vm318, %v313
    // Predicated region
    $region30: #{tpu_custom_call.1} parent=1 // pred_check
      _
    $region31: #{tpu_custom_call.1} parent=1 // pred_check_branch
      %321 = sbr.rel (0) target = $region33
    $region32: #{tpu_custom_call.1} parent=1 // pred_region
      %s323 = ssub.s32 128, 128
      %324 = vsyncadd [#allocation3], %s323
      %s326 = sshll.u32 [#allocation2], 4
      %s327 = int_to_ptr.vmem [resolvable:$true] %s326
      %329 = dma.vmem_to_hbm [thread:$0]  %s327, 128, %s7, [#allocation3]
    $region33: #{tpu_custom_call.1} parent=1 // pred_fallthru
      _
    // Predicated region
    $region34: #{tpu_custom_call.1} parent=1 // pred_check
      _
    $region35: #{tpu_custom_call.1} parent=1 // pred_check_branch
      %331 = sbr.rel (0) target = $region37
    $region36: #{tpu_custom_call.1} parent=1 // pred_region
      %332 = dma.done [#allocation3], 128
    $region37: #{tpu_custom_call.1} parent=1 // pred_fallthru
      _
    %333 = vsyncpa [#allocation3], 1

</llo_original>
